<compile_context>
chip_gen: v7x
topology: tpu7x:2x2x1
jax: 0.10.0
libtpu: 0.0.40
codegen_flags: <defaults>
</compile_context>

<pallas_src>
import jax
import jax.numpy as jnp
from jax import lax
from jax.experimental import pallas as pl
from jax.experimental.pallas import tpu as pltpu


def rnn_seq_kernel(xwx_ref, h0_ref, wc_ref, ys_ref, h_scr):
    """One time-block per grid iteration; hidden slab carried in VMEM scratch.

    xwx_ref: (T_BLK, B_pad, HO_pad) fp32  precomputed x_t @ [Wxh|Wxo] + bias
    h0_ref : (B_pad, HO_pad)        fp32  initial hidden (slab layout), resident
    wc_ref : (HO_pad, HO_pad)       bf16  [Whh|Who] with zero rows >= H, resident
    ys_ref : (T_BLK, B_pad, HO_pad)       per-step [hidden | output | pad]
    h_scr  : (B_pad, HO_pad)        fp32  carried slab across grid blocks
    """
    blk = pl.program_id(0)

    @pl.when(blk == 0)
    def _init():
        h_scr[...] = h0_ref[...]

    wc = wc_ref[...]                      # resident weights, loaded once per block
    n_steps = ys_ref.shape[0]             # static time-block length

    def step(i, h):
        # slab[:, 0:H)   = i2h(cat(x_t, h_{t-1}))   (new hidden)
        # slab[:, H:H+O) = i2o(cat(x_t, h_{t-1}))   (output)
        # Zero rows of Wc kill the stale output / padding columns of h.
        slab = xwx_ref[i] + jnp.dot(h, wc, preferred_element_type=jnp.float32)
        ys_ref[i] = slab.astype(ys_ref.dtype)
        return slab.astype(h.dtype)        # next step's MXU LHS (bf16)

    h_last = lax.fori_loop(0, n_steps, step,
                           h_scr[...].astype(wc.dtype), unroll=True)
    h_scr[...] = h_last.astype(h_scr.dtype)


def _round_up(n, m):
    return ((n + m - 1) // m) * m


def rnn_forward(xs, h0, params, *, compute_dtype=jnp.bfloat16,
                out_dtype=jnp.float32, t_blk=32):
    """Run the RNN cell over a whole sequence (one pallas_call).

    xs: (T, B, I) inputs, h0: (B, H) initial hidden.
    Returns (outputs (T, B, O), hiddens (T, B, H)); step t equals the PyTorch
    module's forward(xs[t], hiddens[t-1]).
    """
    T, B, I = xs.shape
    H = params["whh"].shape[0]
    O = params["who"].shape[1]
    HO = H + O

    B_pad = _round_up(max(B, 8), 8)
    I_pad = _round_up(I, 128)
    HO_pad = _round_up(HO, 128)

    t_blk = max(1, min(t_blk, T))
    T_pad = _round_up(T, t_blk)
    n_blk = T_pad // t_blk

    # ---- host-side fuse + pad + cast (done once for the whole sequence) ----
    wx = jnp.zeros((I_pad, HO_pad), jnp.float32)
    wx = wx.at[:I, :H].set(params["wxh"]).at[:I, H:HO].set(params["wxo"])
    wc = jnp.zeros((HO_pad, HO_pad), jnp.float32)
    wc = wc.at[:H, :H].set(params["whh"]).at[:H, H:HO].set(params["who"])
    b = jnp.zeros((1, HO_pad), jnp.float32)
    b = b.at[:, :H].set(params["bh"]).at[:, H:HO].set(params["bo"])

    xs_p = jnp.zeros((T_pad, B_pad, I_pad), compute_dtype)
    xs_p = xs_p.at[:T, :B, :I].set(xs.astype(compute_dtype))
    h0_p = jnp.zeros((B_pad, HO_pad), jnp.float32)
    h0_p = h0_p.at[:B, :H].set(h0)

    wx = wx.astype(compute_dtype)
    wc = wc.astype(compute_dtype)

    # Non-recurrent half of every step, hoisted OFF the serial chain:
    # one large (T_pad*B_pad, I_pad) @ (I_pad, HO_pad) matmul + bias in XLA.
    xwx = jnp.dot(xs_p.reshape(T_pad * B_pad, I_pad), wx,
                  preferred_element_type=jnp.float32)
    xwx = xwx.reshape(T_pad, B_pad, HO_pad) + b        # fp32, bias folded in

    out_itemsize = jnp.dtype(out_dtype).itemsize
    flops = 2 * T_pad * B_pad * HO_pad * HO_pad        # recurrent matmuls only
    bytes_accessed = (
        xwx.size * 4
        + wc.size * wc.dtype.itemsize
        + h0_p.size * 4
        + T_pad * B_pad * HO_pad * out_itemsize
    )

    # VMEM sizing: double-buffered streamed blocks + resident weights/scratch.
    xwx_blk_bytes = t_blk * B_pad * HO_pad * 4
    ys_blk_bytes = t_blk * B_pad * HO_pad * out_itemsize
    resident_bytes = HO_pad * HO_pad * wc.dtype.itemsize + 2 * B_pad * HO_pad * 4
    vmem_limit = int(min(100 * 2**20,
                         max(8 * 2**20,
                             4 * (xwx_blk_bytes + ys_blk_bytes)
                             + 4 * resident_bytes)))

    ys = pl.pallas_call(
        rnn_seq_kernel,
        out_shape=jax.ShapeDtypeStruct((T_pad, B_pad, HO_pad), out_dtype),
        grid=(n_blk,),
        in_specs=[
            pl.BlockSpec((t_blk, B_pad, HO_pad), lambda t: (t, 0, 0)),  # xwx streamed
            pl.BlockSpec((B_pad, HO_pad), lambda t: (0, 0)),            # h0 resident
            pl.BlockSpec((HO_pad, HO_pad), lambda t: (0, 0)),           # Wc resident
        ],
        out_specs=pl.BlockSpec((t_blk, B_pad, HO_pad), lambda t: (t, 0, 0)),
        scratch_shapes=[pltpu.VMEM((B_pad, HO_pad), jnp.float32)],
        compiler_params=pltpu.CompilerParams(
            dimension_semantics=("arbitrary",),     # serial recurrence over time
            vmem_limit_bytes=vmem_limit,
        ),
        cost_estimate=pl.CostEstimate(
            flops=flops, transcendentals=0, bytes_accessed=bytes_accessed),
    )(xwx, h0_p, wc)

    hiddens = ys[:T, :B, :H]
    outputs = ys[:T, :B, H:HO]
    return outputs, hiddens


def rnn_cell(x, h, params):
    """Module-equivalent single step: forward(input, hidden) -> (output, hidden)."""
    outputs, hiddens = rnn_forward(x[None], h, params)
    return outputs[0], hiddens[0]


def init_params(key, input_size, hidden_size, output_size):
    """Deterministic init mimicking nn.Linear's uniform(-1/sqrt(fan_in), ...)."""
    keys = jax.random.split(key, 4)
    fan_in = input_size + hidden_size
    bound = 1.0 / jnp.sqrt(jnp.float32(fan_in))

    w_i2h = jax.random.uniform(keys[0], (fan_in, hidden_size),
                               minval=-bound, maxval=bound, dtype=jnp.float32)
    b_i2h = jax.random.uniform(keys[1], (1, hidden_size),
                               minval=-bound, maxval=bound, dtype=jnp.float32)
    w_i2o = jax.random.uniform(keys[2], (fan_in, output_size),
                               minval=-bound, maxval=bound, dtype=jnp.float32)
    b_i2o = jax.random.uniform(keys[3], (1, output_size),
                               minval=-bound, maxval=bound, dtype=jnp.float32)

    return {
        "wxh": w_i2h[:input_size, :],   # (I, H)
        "whh": w_i2h[input_size:, :],   # (H, H)
        "bh": b_i2h,                    # (1, H)
        "wxo": w_i2o[:input_size, :],   # (I, O)
        "who": w_i2o[input_size:, :],   # (H, O)
        "bo": b_i2o,                    # (1, O)
    }


def rnn_forward_ref(xs, h0, params, compute_dtype=jnp.float32):
    """Pure-JAX reference: the PyTorch forward applied step by step.

    compute_dtype lets us mimic the kernel's bf16 MXU inputs (fp32 accumulate)
    for a tight numerical comparison.
    """
    w_i2h = jnp.concatenate([params["wxh"], params["whh"]], axis=0)
    w_i2o = jnp.concatenate([params["wxo"], params["who"]], axis=0)

    def step(h, x):
        combined = jnp.concatenate([x, h], axis=1).astype(compute_dtype)
        hidden = jnp.dot(combined, w_i2h.astype(compute_dtype),
                         preferred_element_type=jnp.float32) + params["bh"]
        output = jnp.dot(combined, w_i2o.astype(compute_dtype),
                         preferred_element_type=jnp.float32) + params["bo"]
        return hidden, (output, hidden)

    _, (outputs, hiddens) = jax.lax.scan(step, h0, xs)
    return outputs, hiddens


if __name__ == "__main__":
    input_size, hidden_size, output_size = 16, 32, 8
    batch, seq_len = 2, 8

    key = jax.random.PRNGKey(0)
    k_param, k_x, k_h = jax.random.split(key, 3)

    params = init_params(k_param, input_size, hidden_size, output_size)
    xs = jax.random.normal(k_x, (seq_len, batch, input_size), dtype=jnp.float32)
    h0 = jax.random.normal(k_h, (batch, hidden_size), dtype=jnp.float32)

    # t_blk=3 exercises multi-block time tiling, the scratch hand-off across
    # grid steps, and the padded-tail path (T=8 -> T_pad=9, grid=(3,)).
    outputs, hiddens = rnn_forward(xs, h0, params, t_blk=3)
    jax.block_until_ready((outputs, hiddens))
    assert outputs.shape == (seq_len, batch, output_size)
    assert hiddens.shape == (seq_len, batch, hidden_size)

    # Tight check vs. a reference using the same bf16 matmul inputs / fp32 acc.
    out_bf, hid_bf = rnn_forward_ref(xs, h0, params, compute_dtype=jnp.bfloat16)
    assert jnp.allclose(outputs, out_bf, atol=5e-3, rtol=5e-3)
    assert jnp.allclose(hiddens, hid_bf, atol=5e-3, rtol=5e-3)

    # Loose check vs. the exact fp32 PyTorch-semantics reference.
    # NOTE: the kernel feeds bf16 into the MXU, so hidden-state rounding can
    # drift over very long sequences; pass compute_dtype=jnp.float32 to
    # rnn_forward if fp32-faithful hiddens are required.
    out_f32, hid_f32 = rnn_forward_ref(xs, h0, params, compute_dtype=jnp.float32)
    assert jnp.allclose(outputs, out_f32, atol=1e-1, rtol=1e-1)
    assert jnp.allclose(hiddens, hid_f32, atol=1e-1, rtol=1e-1)

    # Module-equivalent single step (T=1, one grid block) still matches forward().
    out1, hid1 = rnn_cell(xs[0], h0, params)
    jax.block_until_ready((out1, hid1))
    assert out1.shape == (batch, output_size)
    assert hid1.shape == (batch, hidden_size)
    assert jnp.allclose(out1, out_bf[0], atol=5e-3, rtol=5e-3)
    assert jnp.allclose(hid1, hid_bf[0], atol=5e-3, rtol=5e-3)

    print("KERNEL_OK")
</pallas_src>

<mosaic_0001>
module attributes {stable_mosaic.version = 11 : i64} {
  func.func @rnn_seq_kernel(%arg0: i32, %arg1: memref<3x8x128xf32, #tpu.memory_space<vmem>>, %arg2: memref<8x128xf32, #tpu.memory_space<vmem>>, %arg3: memref<128x128xbf16, #tpu.memory_space<vmem>>, %arg4: memref<3x8x128xf32, #tpu.memory_space<vmem>>, %arg5: memref<8x128xf32, #tpu.memory_space<vmem>>) attributes {dimension_semantics = [#tpu.dimension_semantics<arbitrary>], iteration_bounds = array<i64: 3>, scalar_prefetch = 0 : i64, scratch_operands = 1 : i64, tpu.core_type = #tpu.core_type<tc>, window_params = [{transform_indices = @transform_0, window_bounds = array<i64: 3, 8, 128>}, {pipeline_mode = #tpu.pipeline_mode<synchronous>, transform_indices = @transform_1, window_bounds = array<i64: 8, 128>}, {pipeline_mode = #tpu.pipeline_mode<synchronous>, transform_indices = @transform_2, window_bounds = array<i64: 128, 128>}, {transform_indices = @transform_3, window_bounds = array<i64: 3, 8, 128>}]} {
    %c0_i32 = arith.constant 0 : i32
    %0 = arith.cmpi eq, %arg0, %c0_i32 : i32
    %1 = arith.extui %0 : i1 to i32
    %c0_i32_0 = arith.constant 0 : i32
    %2 = arith.cmpi ne, %1, %c0_i32_0 : i32
    scf.if %2 {
      %c0_21 = arith.constant 0 : index
      %c0_22 = arith.constant 0 : index
      %38 = vector.load %arg2[%c0_21, %c0_22] : memref<8x128xf32, #tpu.memory_space<vmem>>, vector<8x128xf32>
      %c0_23 = arith.constant 0 : index
      %c0_24 = arith.constant 0 : index
      %39 = vector.load %arg5[%c0_23, %c0_24] : memref<8x128xf32, #tpu.memory_space<vmem>>, vector<8x128xf32>
      tpu.vector_store %arg5[%c0_23, %c0_24], %38 {strides = array<i32>} : memref<8x128xf32, #tpu.memory_space<vmem>>, vector<8x128xf32>,
    } else {
    }
    %c0 = arith.constant 0 : index
    %c0_1 = arith.constant 0 : index
    %3 = vector.load %arg3[%c0, %c0_1] : memref<128x128xbf16, #tpu.memory_space<vmem>>, vector<128x128xbf16>
    %c0_2 = arith.constant 0 : index
    %c0_3 = arith.constant 0 : index
    %4 = vector.load %arg5[%c0_2, %c0_3] : memref<8x128xf32, #tpu.memory_space<vmem>>, vector<8x128xf32>
    %5 = arith.truncf %4 : vector<8x128xf32> to vector<8x128xbf16>
    %c0_i32_4 = arith.constant 0 : i32
    %6 = arith.index_cast %c0_i32_4 : i32 to index
    %c0_5 = arith.constant 0 : index
    %c0_6 = arith.constant 0 : index
    %7 = vector.load %arg1[%6, %c0_5, %c0_6] : memref<3x8x128xf32, #tpu.memory_space<vmem>>, vector<1x8x128xf32>
    %8 = vector.shape_cast %7 : vector<1x8x128xf32> to vector<8x128xf32>
    %cst = arith.constant dense<0.000000e+00> : vector<8x128xf32>
    %9 = tpu.matmul %5, %3, %cst {dimension_numbers = #tpu.dot_dimension_numbers<[1], [0], [0], [1], [0, 0, 1, 1], [], []>} : vector<8x128xbf16>, vector<128x128xbf16>, vector<8x128xf32> -> vector<8x128xf32>
    %10 = arith.addf %8, %9 : vector<8x128xf32>
    %11 = arith.index_cast %c0_i32_4 : i32 to index
    %c0_7 = arith.constant 0 : index
    %c0_8 = arith.constant 0 : index
    %12 = vector.load %arg4[%11, %c0_7, %c0_8] : memref<3x8x128xf32, #tpu.memory_space<vmem>>, vector<1x8x128xf32>
    %13 = vector.shape_cast %12 : vector<1x8x128xf32> to vector<8x128xf32>
    %14 = vector.shape_cast %10 : vector<8x128xf32> to vector<1x8x128xf32>
    tpu.vector_store %arg4[%11, %c0_7, %c0_8], %14 {strides = array<i32>} : memref<3x8x128xf32, #tpu.memory_space<vmem>>, vector<1x8x128xf32>,
    %15 = arith.truncf %10 : vector<8x128xf32> to vector<8x128xbf16>
    %c1_i32 = arith.constant 1 : i32
    %16 = arith.index_cast %c1_i32 : i32 to index
    %c0_9 = arith.constant 0 : index
    %c0_10 = arith.constant 0 : index
    %17 = vector.load %arg1[%16, %c0_9, %c0_10] : memref<3x8x128xf32, #tpu.memory_space<vmem>>, vector<1x8x128xf32>
    %18 = vector.shape_cast %17 : vector<1x8x128xf32> to vector<8x128xf32>
    %cst_11 = arith.constant dense<0.000000e+00> : vector<8x128xf32>
    %19 = tpu.matmul %15, %3, %cst_11 {dimension_numbers = #tpu.dot_dimension_numbers<[1], [0], [0], [1], [0, 0, 1, 1], [], []>} : vector<8x128xbf16>, vector<128x128xbf16>, vector<8x128xf32> -> vector<8x128xf32>
    %20 = arith.addf %18, %19 : vector<8x128xf32>
    %21 = arith.index_cast %c1_i32 : i32 to index
    %c0_12 = arith.constant 0 : index
    %c0_13 = arith.constant 0 : index
    %22 = vector.load %arg4[%21, %c0_12, %c0_13] : memref<3x8x128xf32, #tpu.memory_space<vmem>>, vector<1x8x128xf32>
    %23 = vector.shape_cast %22 : vector<1x8x128xf32> to vector<8x128xf32>
    %24 = vector.shape_cast %20 : vector<8x128xf32> to vector<1x8x128xf32>
    tpu.vector_store %arg4[%21, %c0_12, %c0_13], %24 {strides = array<i32>} : memref<3x8x128xf32, #tpu.memory_space<vmem>>, vector<1x8x128xf32>,
    %25 = arith.truncf %20 : vector<8x128xf32> to vector<8x128xbf16>
    %c2_i32 = arith.constant 2 : i32
    %26 = arith.index_cast %c2_i32 : i32 to index
    %c0_14 = arith.constant 0 : index
    %c0_15 = arith.constant 0 : index
    %27 = vector.load %arg1[%26, %c0_14, %c0_15] : memref<3x8x128xf32, #tpu.memory_space<vmem>>, vector<1x8x128xf32>
    %28 = vector.shape_cast %27 : vector<1x8x128xf32> to vector<8x128xf32>
    %cst_16 = arith.constant dense<0.000000e+00> : vector<8x128xf32>
    %29 = tpu.matmul %25, %3, %cst_16 {dimension_numbers = #tpu.dot_dimension_numbers<[1], [0], [0], [1], [0, 0, 1, 1], [], []>} : vector<8x128xbf16>, vector<128x128xbf16>, vector<8x128xf32> -> vector<8x128xf32>
    %30 = arith.addf %28, %29 : vector<8x128xf32>
    %31 = arith.index_cast %c2_i32 : i32 to index
    %c0_17 = arith.constant 0 : index
    %c0_18 = arith.constant 0 : index
    %32 = vector.load %arg4[%31, %c0_17, %c0_18] : memref<3x8x128xf32, #tpu.memory_space<vmem>>, vector<1x8x128xf32>
    %33 = vector.shape_cast %32 : vector<1x8x128xf32> to vector<8x128xf32>
    %34 = vector.shape_cast %30 : vector<8x128xf32> to vector<1x8x128xf32>
    tpu.vector_store %arg4[%31, %c0_17, %c0_18], %34 {strides = array<i32>} : memref<3x8x128xf32, #tpu.memory_space<vmem>>, vector<1x8x128xf32>,
    %35 = arith.truncf %30 : vector<8x128xf32> to vector<8x128xbf16>
    %c3_i32 = arith.constant 3 : i32
    %36 = arith.extf %35 : vector<8x128xbf16> to vector<8x128xf32>
    %c0_19 = arith.constant 0 : index
    %c0_20 = arith.constant 0 : index
    %37 = vector.load %arg5[%c0_19, %c0_20] : memref<8x128xf32, #tpu.memory_space<vmem>>, vector<8x128xf32>
    tpu.vector_store %arg5[%c0_19, %c0_20], %36 {strides = array<i32>} : memref<8x128xf32, #tpu.memory_space<vmem>>, vector<8x128xf32>,
    return
  }
  func.func @transform_0(%arg0: i32) -> (i32, i32, i32) {
    %c0_i32 = arith.constant 0 : i32
    %c0_i32_0 = arith.constant 0 : i32
    %c0_i32_1 = arith.constant 0 : i32
    return %arg0, %c0_i32, %c0_i32_0 : i32, i32, i32
  }
  func.func @transform_1(%arg0: i32) -> (i32, i32) {
    %c0_i32 = arith.constant 0 : i32
    %c0_i32_0 = arith.constant 0 : i32
    %c0_i32_1 = arith.constant 0 : i32
    return %c0_i32, %c0_i32_0 : i32, i32
  }
  func.func @transform_2(%arg0: i32) -> (i32, i32) {
    %c0_i32 = arith.constant 0 : i32
    %c0_i32_0 = arith.constant 0 : i32
    %c0_i32_1 = arith.constant 0 : i32
    return %c0_i32, %c0_i32_0 : i32, i32
  }
  func.func @transform_3(%arg0: i32) -> (i32, i32, i32) {
    %c0_i32 = arith.constant 0 : i32
    %c0_i32_0 = arith.constant 0 : i32
    %c0_i32_1 = arith.constant 0 : i32
    return %arg0, %c0_i32, %c0_i32_0 : i32, i32, i32
  }
}

</mosaic_0001>

<llo_original>
// kernel: tpu_custom_call.1
$region0: #{tpu_custom_call.1}
  #allocation0 [shape = 'u32[]', space=smem, size = 0x4, offset = 0x4, fixed_abs, tag = 'smem constant byte address 0x4 - core index']
  #allocation1 [shape = 'u32[144,128]{1,0:T(1,128)}', space=vmem, size = 0x12000, scoped, tag = 'internal scratch']
  #allocation2 [shape = 'f32[8,128]{1,0:T(8,128)}', space=vmem, size = 0x1000, scoped, tag = 'scratch operand']
  %s0 = inlined_call_operand.hbm [shape: f32[9,8,128], index: 0, kind: input, shape index: {}]
  %s1 = inlined_call_operand.hbm [shape: f32[8,128], index: 1, kind: input, shape index: {}]
  %s2 = inlined_call_operand.hbm [shape: bf16[128,128], index: 2, kind: input, shape index: {}]
  %s3 = inlined_call_operand.hbm [shape: f32[9,8,128], index: 3, kind: output, shape index: {}]
  %s4 = sld [smem:[#allocation0]]
  $region61: #{tpu_custom_call.1} parent=0
    _
  %s6 = ssub.s32 1, %s4
  %s7 = scalar_select 0, %s6, %s4
  $region1: #{tpu_custom_call.1} parent=0
    #allocation3 [shape = 'u8[24576]{0}', space=vmem, size = 0x6000, scoped, tag = 'input window, operand 0']
    #allocation4 [shape = 's32[2]{0}', space=sflag, size = 0x8, scoped, tag = 'scoped memory for tpu_custom_call.1']
    #allocation5 [shape = 's32[2]{0}', space=sflag, size = 0x8, scoped, tag = 'scoped memory for tpu_custom_call.1']
    #allocation6 [shape = 'u8[4096]{0}', space=vmem, size = 0x1000, scoped, tag = 'input window, operand 1, single buffered']
    #allocation7 [shape = 's32[1]{0}', space=sflag, size = 0x4, scoped, tag = 'scoped memory for tpu_custom_call.1']
    #allocation8 [shape = 'u8[32768]{0}', space=vmem, size = 0x8000, scoped, tag = 'input window, operand 2, single buffered']
    #allocation9 [shape = 'u8[24576]{0}', space=vmem, size = 0x6000, scoped, tag = 'output window, operand 0']
    %8 = vsyncpa [#allocation4], 0
    %s9 = scalar_lea.sflag [#allocation4], 1
    %10 = vsyncpa %s9, 0
    %11 = vsyncpa [#allocation7], 0
    %12 = vsyncpa [#allocation5], 0
    %s13 = scalar_lea.sflag [#allocation5], 1
    %14 = vsyncpa %s13, 0
    loop: start=0, step=1, limit=5
    $region2: #{tpu_custom_call.1} parent=1 // loop_pre_header
      _
    $region3: #{tpu_custom_call.1} parent=1 // loop_header
      %s16 = sphi 0, %s20
      %p17 = scmp.ge.s32.totalorder %s16, 5
      %s26 = sphi 0, %s28
      %s29 = sphi 0, %s26
      %s30 = sphi 0, %s29
      %s46 = sphi 0, %s30
      %s50 = sphi 0, %s50
      %s52 = sphi 0, %s50
      %s53 = sphi 0, %s52
      %s67 = sphi 0, %s53
      %s71 = sphi 0, %s71
      %s73 = sphi 0, %s71
      %s74 = sphi 0, %s73
      %s88 = sphi 0, %s74
      %s94 = sphi 0, %s96
      %s97 = sphi 0, %s94
      %s98 = sphi 0, %s97
      %s114 = sphi 0, %s98
    $region4: #{tpu_custom_call.1} parent=1 // loop_header_branch
      %19 = sbr.rel (%p17) target = $region8
    $region5: #{tpu_custom_call.1} parent=1 // loop_body
      %s21 = ssub.s32 %s16, 1
      %s22 = ssub.s32 %s16, 2
      %s23 = sadd.s32 %s16, 1
      %s24 = ssub.s32 %s16, %s23
      %p25 = scmp.eq.s32.totalorder %s24, 0
      %s27 = sadd.s32 %s26, 1
      %s28 = scalar_select %p25, %s26, %s27
      %p31 = pneg %p25
      %p32 = scmp.eq.s32.totalorder %s16, 2
      %p33 = por %p31, %p32
      %p34 = scmp.ne.s32.totalorder %s26, %s29
      %p35 = scmp.eq.s32.totalorder %s16, 0
      %p36 = por %p34, %p35
      %p37 = scmp.ne.s32.totalorder %s26, %s29
      %p38 = scmp.eq.s32.totalorder %s21, 2
      %p39 = por %p37, %p38
      %p40 = scmp.ne.s32.totalorder %s29, %s30
      %p41 = scmp.eq.s32.totalorder %s21, 0
      %p42 = por %p40, %p41
      %p43 = scmp.ne.s32.totalorder %s29, %s30
      %p44 = scmp.eq.s32.totalorder %s22, 2
      %p45 = por %p43, %p44
      %p47 = scmp.ne.s32.totalorder %s30, %s46
      %p48 = scmp.eq.s32.totalorder %s22, 0
      %p49 = por %p47, %p48
      %s51 = sadd.s32 %s50, 1
      %p54 = scmp.eq.s32.totalorder %s16, 2
      %p55 = scmp.ne.s32.totalorder %s50, %s52
      %p56 = scmp.eq.s32.totalorder %s16, 0
      %p57 = por %p55, %p56
      %p58 = scmp.ne.s32.totalorder %s50, %s52
      %p59 = scmp.eq.s32.totalorder %s21, 2
      %p60 = por %p58, %p59
      %p61 = scmp.ne.s32.totalorder %s52, %s53
      %p62 = scmp.eq.s32.totalorder %s21, 0
      %p63 = por %p61, %p62
      %p64 = scmp.ne.s32.totalorder %s52, %s53
      %p65 = scmp.eq.s32.totalorder %s22, 2
      %p66 = por %p64, %p65
      %p68 = scmp.ne.s32.totalorder %s53, %s67
      %p69 = scmp.eq.s32.totalorder %s22, 0
      %p70 = por %p68, %p69
      %s72 = sadd.s32 %s71, 1
      %p75 = scmp.eq.s32.totalorder %s16, 2
      %p76 = scmp.ne.s32.totalorder %s71, %s73
      %p77 = scmp.eq.s32.totalorder %s16, 0
      %p78 = por %p76, %p77
      %p79 = scmp.ne.s32.totalorder %s71, %s73
      %p80 = scmp.eq.s32.totalorder %s21, 2
      %p81 = por %p79, %p80
      %p82 = scmp.ne.s32.totalorder %s73, %s74
      %p83 = scmp.eq.s32.totalorder %s21, 0
      %p84 = por %p82, %p83
      %p85 = scmp.ne.s32.totalorder %s73, %s74
      %p86 = scmp.eq.s32.totalorder %s22, 2
      %p87 = por %p85, %p86
      %p89 = scmp.ne.s32.totalorder %s74, %s88
      %p90 = scmp.eq.s32.totalorder %s22, 0
      %p91 = por %p89, %p90
      %s92 = ssub.s32 %s16, %s23
      %p93 = scmp.eq.s32.totalorder %s92, 0
      %s95 = sadd.s32 %s94, 1
      %s96 = scalar_select %p93, %s94, %s95
      %p99 = pneg %p93
      %p100 = scmp.eq.s32.totalorder %s16, 2
      %p101 = por %p99, %p100
      %p102 = scmp.ne.s32.totalorder %s94, %s97
      %p103 = scmp.eq.s32.totalorder %s16, 0
      %p104 = por %p102, %p103
      %p105 = scmp.ne.s32.totalorder %s94, %s97
      %p106 = scmp.eq.s32.totalorder %s21, 2
      %p107 = por %p105, %p106
      %p108 = scmp.ne.s32.totalorder %s97, %s98
      %p109 = scmp.eq.s32.totalorder %s21, 0
      %p110 = por %p108, %p109
      %p111 = scmp.ne.s32.totalorder %s97, %s98
      %p112 = scmp.eq.s32.totalorder %s22, 2
      %p113 = por %p111, %p112
      %p115 = scmp.ne.s32.totalorder %s98, %s114
      %p116 = scmp.eq.s32.totalorder %s22, 0
      %p117 = por %p115, %p116
      %p118 = scmp.le.s32.totalorder 1, %s16
      %p119 = scmp.lt.s32.totalorder %s16, 4
      %p120 = pnand %p118, %p119
      %p121 = pneg %p120
      // Predicated region
      $region9: #{tpu_custom_call.1} parent=5 // pred_check
        _
      $region10: #{tpu_custom_call.1} parent=5 // pred_check_branch
        %123 = sbr.rel (%p120) target = $region12
      $region11: #{tpu_custom_call.1} parent=5 // pred_region
        %s124 = ssub.s32 %s16, 1
        // Predicated region
        $region13: #{tpu_custom_call.1} parent=11 // pred_check
          %p125 = pneg %p63
        $region14: #{tpu_custom_call.1} parent=11 // pred_check_branch
          %127 = sbr.rel (%p125) target = $region16
        $region15: #{tpu_custom_call.1} parent=11 // pred_region
          %s129 = ssub.s32 128, 128
          %130 = vsyncadd [#allocation7], %s129
          %s132 = sshll.u32 [#allocation6], 4
          %s133 = int_to_ptr.vmem [resolvable:$true] %s132
          %135 = dma.hbm_to_vmem [thread:$0]  %s1, 128, %s133, [#allocation7]
        $region16: #{tpu_custom_call.1} parent=11 // pred_fallthru
          _
        // Predicated region
        $region17: #{tpu_custom_call.1} parent=11 // pred_check
          %p136 = pneg %p84
        $region18: #{tpu_custom_call.1} parent=11 // pred_check_branch
          %138 = sbr.rel (%p136) target = $region20
        $region19: #{tpu_custom_call.1} parent=11 // pred_region
          %s140 = ssub.s32 1024, 1024
          %141 = vsyncadd [#allocation7], %s140
          %s142 = sshll.u32 [#allocation8], 4
          %s143 = int_to_ptr.vmem [resolvable:$true] %s142
          %148 = dma.hbm_to_vmem [thread:$0]  %s2, 1024, %s143, [#allocation7], 64, 64, 4
        $region20: #{tpu_custom_call.1} parent=11 // pred_fallthru
          _
      $region12: #{tpu_custom_call.1} parent=5 // pred_fallthru
        _
      %p149 = scmp.lt.s32.totalorder %s16, 3
      // Predicated region
      $region21: #{tpu_custom_call.1} parent=5 // pred_check
        %p150 = pneg %p149
      $region22: #{tpu_custom_call.1} parent=5 // pred_check_branch
        %152 = sbr.rel (%p150) target = $region24
      $region23: #{tpu_custom_call.1} parent=5 // pred_region
        // Predicated region
        $region25: #{tpu_custom_call.1} parent=23 // pred_check
          %p153 = pneg %p36
        $region26: #{tpu_custom_call.1} parent=23 // pred_check_branch
          %155 = sbr.rel (%p153) target = $region28
        $region27: #{tpu_custom_call.1} parent=23 // pred_region
          %s156 = sand.u32 %s26, 1
          %s157 = scalar_lea.sflag [#allocation4], %s156
          %s158 = sand.u32 %s26, 1
          %s159 = smul.addr %s158, 24
          %s160 = scalar_lea.vmem [#allocation3], %s159
          %s161 = smul.u32 3, %s16
          %s163 = ssub.s32 384, 384
          %164 = vsyncadd %s157, %s163
          %s165 = smul.addr %s161, 128
          %s166 = scalar_lea.hbm %s0, %s165
          %s167 = sshll.u32 %s160, 4
          %s168 = int_to_ptr.vmem [resolvable:$true] %s167
          %173 = dma.hbm_to_vmem [thread:$0]  %s166, 384, %s168, %s157, 128, 128, 8
        $region28: #{tpu_custom_call.1} parent=23 // pred_fallthru
          _
      $region24: #{tpu_custom_call.1} parent=5 // pred_fallthru
        _
      %p174 = scmp.le.s32.totalorder 1, %s16
      %p175 = scmp.lt.s32.totalorder %s16, 4
      %p176 = pnand %p174, %p175
      %p177 = pneg %p176
      // Predicated region
      $region29: #{tpu_custom_call.1} parent=5 // pred_check
        _
      $region30: #{tpu_custom_call.1} parent=5 // pred_check_branch
        %179 = sbr.rel (%p176) target = $region32
      $region31: #{tpu_custom_call.1} parent=5 // pred_region
        %s180 = ssub.s32 %s16, 1
        %s181 = sand.u32 %s29, 1
        %s182 = scalar_lea.sflag [#allocation4], %s181
        %s183 = sand.u32 %s29, 1
        %s184 = smul.addr %s183, 24
        %s185 = scalar_lea.vmem [#allocation3], %s184
        // Predicated region
        $region33: #{tpu_custom_call.1} parent=31 // pred_check
          %p186 = pneg %p42
        $region34: #{tpu_custom_call.1} parent=31 // pred_check_branch
          %188 = sbr.rel (%p186) target = $region36
        $region35: #{tpu_custom_call.1} parent=31 // pred_region
          %189 = dma.done %s182, 384
        $region36: #{tpu_custom_call.1} parent=31 // pred_fallthru
          _
        // Predicated region
        $region37: #{tpu_custom_call.1} parent=31 // pred_check
          %p190 = pneg %p63
        $region38: #{tpu_custom_call.1} parent=31 // pred_check_branch
          %192 = sbr.rel (%p190) target = $region40
        $region39: #{tpu_custom_call.1} parent=31 // pred_region
          %193 = dma.done [#allocation7], 128
        $region40: #{tpu_custom_call.1} parent=31 // pred_fallthru
          _
        // Predicated region
        $region41: #{tpu_custom_call.1} parent=31 // pred_check
          %p194 = pneg %p84
        $region42: #{tpu_custom_call.1} parent=31 // pred_check_branch
          %196 = sbr.rel (%p194) target = $region44
        $region43: #{tpu_custom_call.1} parent=31 // pred_region
          %197 = dma.done [#allocation7], 1024
        $region44: #{tpu_custom_call.1} parent=31 // pred_fallthru
          _
        %s198 = sand.u32 %s29, 1
        %s199 = scalar_lea.sflag [#allocation4], %s198
        %s200 = sand.u32 %s29, 1
        %s201 = smul.addr %s200, 24
        %s202 = scalar_lea.vmem [#allocation3], %s201
        %p203 = pneg %p42
        %p204 = pneg %p39
        %p205 = pneg %p63
        %p206 = pneg %p60
        %p207 = pneg %p84
        %p208 = pneg %p81
        %p209 = pneg %p110
        %p210 = pneg %p107
        %s211 = sand.u32 %s97, 1
        %s212 = scalar_lea.sflag [#allocation5], %s211
        %s213 = sand.u32 %s97, 1
        %s214 = smul.addr %s213, 24
        %s215 = scalar_lea.vmem [#allocation9], %s214
        %s216 = smul.u32 3, %s21
        %s217 = smul.u32 3, %s21
        %p219 = scmp.eq.s32.totalorder %s21, 0
        // Predicated region
        $region45: #{tpu_custom_call.1} parent=31 // pred_check
          %p220 = pneg %p219
        $region46: #{tpu_custom_call.1} parent=31 // pred_check_branch
          %222 = sbr.rel (%p220) target = $region48
        $region47: #{tpu_custom_call.1} parent=31 // pred_region
          %v223 = vld [vmem:[#allocation6] sm:$0xff]
          %224 = vst [vmem:[#allocation2] sm:$0xff] %v223
        $region48: #{tpu_custom_call.1} parent=31 // pred_fallthru
          _
        %v225 = vld [vmem:[#allocation8] sm:$0xf]
        %v226 = vld [vmem:[#allocation8 + $0x4] sm:$0xf]
        %v227 = vld [vmem:[#allocation8 + $0x8] sm:$0xf]
        %v228 = vld [vmem:[#allocation8 + $0xc] sm:$0xf]
        %v229 = vld [vmem:[#allocation8 + $0x10] sm:$0xf]
        %v230 = vld [vmem:[#allocation8 + $0x14] sm:$0xf]
        %v231 = vld [vmem:[#allocation8 + $0x18] sm:$0xf]
        %v232 = vld [vmem:[#allocation8 + $0x1c] sm:$0xf]
        %v233 = vld [vmem:[#allocation8 + $0x20] sm:$0xf]
        %v234 = vld [vmem:[#allocation8 + $0x24] sm:$0xf]
        %v235 = vld [vmem:[#allocation8 + $0x28] sm:$0xf]
        %v236 = vld [vmem:[#allocation8 + $0x2c] sm:$0xf]
        %v237 = vld [vmem:[#allocation8 + $0x30] sm:$0xf]
        %v238 = vld [vmem:[#allocation8 + $0x34] sm:$0xf]
        %v239 = vld [vmem:[#allocation8 + $0x38] sm:$0xf]
        %v240 = vld [vmem:[#allocation8 + $0x3c] sm:$0xf]
        %v241 = vld [vmem:[#allocation2] sm:$0xff]
        %v242 = vpack.c.bf16 %v241, %v241
        %v243 = vld [vmem:[%s185] sm:$0xff]
        %v260 = vunpack.c.l.b16 %v225
        %v261 = vunpack.c.l.b16 %v226
        %v262 = vunpack.c.l.b16 %v227
        %v263 = vunpack.c.l.b16 %v228
        %v264 = vunpack.c.l.b16 %v229
        %v265 = vunpack.c.l.b16 %v230
        %v266 = vunpack.c.l.b16 %v231
        %v267 = vunpack.c.l.b16 %v232
        %v268 = vunpack.c.l.b16 %v233
        %v269 = vunpack.c.l.b16 %v234
        %v270 = vunpack.c.l.b16 %v235
        %v271 = vunpack.c.l.b16 %v236
        %v272 = vunpack.c.l.b16 %v237
        %v273 = vunpack.c.l.b16 %v238
        %v274 = vunpack.c.l.b16 %v239
        %v275 = vunpack.c.l.b16 %v240
        %v276 = vpack.c.b16 %v261, %v260
        %v277 = vpack.c.b16 %v263, %v262
        %v278 = vpack.c.b16 %v265, %v264
        %v279 = vpack.c.b16 %v267, %v266
        %v280 = vpack.c.b16 %v269, %v268
        %v281 = vpack.c.b16 %v271, %v270
        %v282 = vpack.c.b16 %v273, %v272
        %v283 = vpack.c.b16 %v275, %v274
        %292 = vmatprep.subr.bf16.mxu0 0
        %293 = vmatpush1.bf16.msra.mxu0 %v276
        %294 = vmatprep.subr.bf16.mxu0 0
        %295 = vmatpush1.bf16.msra.mxu0 %v277
        %296 = vmatprep.subr.bf16.mxu0 0
        %297 = vmatpush1.bf16.msra.mxu0 %v278
        %298 = vmatprep.subr.bf16.mxu0 0
        %299 = vmatpush1.bf16.msra.mxu0 %v279
        %300 = vmatprep.subr.bf16.mxu0 0
        %301 = vmatpush1.bf16.msra.mxu0 %v280
        %302 = vmatprep.subr.bf16.mxu0 0
        %303 = vmatpush1.bf16.msra.mxu0 %v281
        %304 = vmatprep.subr.bf16.mxu0 0
        %305 = vmatpush1.bf16.msra.mxu0 %v282
        %306 = vmatprep.subr.bf16.mxu0 0
        %307 = vmatpush1.bf16.msra.mxu0 %v283
        %308 = vmatprep.subr.bf16.mxu0 0
        %309 = vmatpush1.bf16.msra.mxu0 0
        %310 = vmatprep.subr.bf16.mxu0 0
        %311 = vmatpush1.bf16.msra.mxu0 0
        %312 = vmatprep.subr.bf16.mxu0 0
        %313 = vmatpush1.bf16.msra.mxu0 0
        %314 = vmatprep.subr.bf16.mxu0 0
        %315 = vmatpush1.bf16.msra.mxu0 0
        %316 = vmatprep.subr.bf16.mxu0 0
        %317 = vmatpush1.bf16.msra.mxu0 0
        %318 = vmatprep.subr.bf16.mxu0 0
        %319 = vmatpush1.bf16.msra.mxu0 0
        %320 = vmatprep.subr.bf16.mxu0 0
        %321 = vmatpush1.bf16.msra.mxu0 0
        %322 = vmatprep.subr.bf16.mxu0 0
        %323 = vmatpush1.bf16.msra.mxu0 0
        %324 = vmatprep.mubr.bf16.mxu0 0
        %325 = vmatmul.mubr.bf16.gmra.mrb[0].mxu0 %v242
        %v326 = vpop.f32.mrb[0].mxu0
        %v327 = vadd.f32 0.0, %v326
        %v328 = vpop.f32.mrb[0].mxu0
        %v329 = vpop.f32.mrb[0].mxu0
        %v330 = vpop.f32.mrb[0].mxu0
        %331 = vdwg.mxu0
        %v332 = vadd.f32 %v243, %v327
        %333 = vst [vmem:[%s215] sm:$0xff] %v332
        %v334 = vpack.c.bf16 %v332, %v332
        %s335 = scalar_lea.vmem %s185, 8 [#allocation3]
        %v336 = vld [vmem:[%s335] sm:$0xff]
        %337 = vmatprep.subr.bf16.mxu0 0
        %338 = vmatpush1.bf16.msra.mxu0 %v276
        %339 = vmatprep.subr.bf16.mxu0 0
        %340 = vmatpush1.bf16.msra.mxu0 %v277
        %341 = vmatprep.subr.bf16.mxu0 0
        %342 = vmatpush1.bf16.msra.mxu0 %v278
        %343 = vmatprep.subr.bf16.mxu0 0
        %344 = vmatpush1.bf16.msra.mxu0 %v279
        %345 = vmatprep.subr.bf16.mxu0 0
        %346 = vmatpush1.bf16.msra.mxu0 %v280
        %347 = vmatprep.subr.bf16.mxu0 0
        %348 = vmatpush1.bf16.msra.mxu0 %v281
        %349 = vmatprep.subr.bf16.mxu0 0
        %350 = vmatpush1.bf16.msra.mxu0 %v282
        %351 = vmatprep.subr.bf16.mxu0 0
        %352 = vmatpush1.bf16.msra.mxu0 %v283
        %353 = vmatprep.subr.bf16.mxu0 0
        %354 = vmatpush1.bf16.msra.mxu0 0
        %355 = vmatprep.subr.bf16.mxu0 0
        %356 = vmatpush1.bf16.msra.mxu0 0
        %357 = vmatprep.subr.bf16.mxu0 0
        %358 = vmatpush1.bf16.msra.mxu0 0
        %359 = vmatprep.subr.bf16.mxu0 0
        %360 = vmatpush1.bf16.msra.mxu0 0
        %361 = vmatprep.subr.bf16.mxu0 0
        %362 = vmatpush1.bf16.msra.mxu0 0
        %363 = vmatprep.subr.bf16.mxu0 0
        %364 = vmatpush1.bf16.msra.mxu0 0
        %365 = vmatprep.subr.bf16.mxu0 0
        %366 = vmatpush1.bf16.msra.mxu0 0
        %367 = vmatprep.subr.bf16.mxu0 0
        %368 = vmatpush1.bf16.msra.mxu0 0
        %369 = vmatprep.mubr.bf16.mxu0 0
        %370 = vmatmul.mubr.bf16.gmra.mrb[0].mxu0 %v334
        %v371 = vpop.f32.mrb[0].mxu0
        %v372 = vadd.f32 0.0, %v371
        %v373 = vpop.f32.mrb[0].mxu0
        %v374 = vpop.f32.mrb[0].mxu0
        %v375 = vpop.f32.mrb[0].mxu0
        %376 = vdwg.mxu0
        %v377 = vadd.f32 %v336, %v372
        %s378 = scalar_lea.vmem %s215, 8 [#allocation9]
        %379 = vst [vmem:[%s378] sm:$0xff] %v377
        %v380 = vpack.c.bf16 %v377, %v377
        %s381 = scalar_lea.vmem %s185, 16 [#allocation3]
        %v382 = vld [vmem:[%s381] sm:$0xff]
        %383 = vmatprep.subr.bf16.mxu0 0
        %384 = vmatpush1.bf16.msra.mxu0 %v276
        %385 = vmatprep.subr.bf16.mxu0 0
        %386 = vmatpush1.bf16.msra.mxu0 %v277
        %387 = vmatprep.subr.bf16.mxu0 0
        %388 = vmatpush1.bf16.msra.mxu0 %v278
        %389 = vmatprep.subr.bf16.mxu0 0
        %390 = vmatpush1.bf16.msra.mxu0 %v279
        %391 = vmatprep.subr.bf16.mxu0 0
        %392 = vmatpush1.bf16.msra.mxu0 %v280
        %393 = vmatprep.subr.bf16.mxu0 0
        %394 = vmatpush1.bf16.msra.mxu0 %v281
        %395 = vmatprep.subr.bf16.mxu0 0
        %396 = vmatpush1.bf16.msra.mxu0 %v282
        %397 = vmatprep.subr.bf16.mxu0 0
        %398 = vmatpush1.bf16.msra.mxu0 %v283
        %399 = vmatprep.subr.bf16.mxu0 0
        %400 = vmatpush1.bf16.msra.mxu0 0
        %401 = vmatprep.subr.bf16.mxu0 0
        %402 = vmatpush1.bf16.msra.mxu0 0
        %403 = vmatprep.subr.bf16.mxu0 0
        %404 = vmatpush1.bf16.msra.mxu0 0
        %405 = vmatprep.subr.bf16.mxu0 0
        %406 = vmatpush1.bf16.msra.mxu0 0
        %407 = vmatprep.subr.bf16.mxu0 0
        %408 = vmatpush1.bf16.msra.mxu0 0
        %409 = vmatprep.subr.bf16.mxu0 0
        %410 = vmatpush1.bf16.msra.mxu0 0
        %411 = vmatprep.subr.bf16.mxu0 0
        %412 = vmatpush1.bf16.msra.mxu0 0
        %413 = vmatprep.subr.bf16.mxu0 0
        %414 = vmatpush1.bf16.msra.mxu0 0
        %415 = vmatprep.mubr.bf16.mxu0 0
        %416 = vmatmul.mubr.bf16.gmra.mrb[0].mxu0 %v380
        %v417 = vpop.f32.mrb[0].mxu0
        %v418 = vadd.f32 0.0, %v417
        %v419 = vpop.f32.mrb[0].mxu0
        %v420 = vpop.f32.mrb[0].mxu0
        %v421 = vpop.f32.mrb[0].mxu0
        %422 = vdwg.mxu0
        %v423 = vadd.f32 %v382, %v418
        %s424 = scalar_lea.vmem %s215, 16 [#allocation9]
        %425 = vst [vmem:[%s424] sm:$0xff] %v423
        %v426 = vpack.c.bf16 %v423, %v423
        %v427 = vunpack.c.l.bf16 %v426
        %428 = vst [vmem:[#allocation2] sm:$0xff] %v427
        %s429 = sand.u32 %s97, 1
        %s430 = scalar_lea.sflag [#allocation5], %s429
        %s431 = sand.u32 %s97, 1
        %s432 = smul.addr %s431, 24
        %s433 = scalar_lea.vmem [#allocation9], %s432
        // Predicated region
        $region49: #{tpu_custom_call.1} parent=31 // pred_check
          %p434 = pneg %p107
        $region50: #{tpu_custom_call.1} parent=31 // pred_check_branch
          %436 = sbr.rel (%p434) target = $region52
        $region51: #{tpu_custom_call.1} parent=31 // pred_region
          %s437 = smul.u32 3, %s21
          %s439 = ssub.s32 384, 384
          %440 = vsyncadd %s430, %s439
          %s441 = smul.addr %s437, 128
          %s442 = scalar_lea.hbm %s3, %s441
          %s443 = sshll.u32 %s433, 4
          %s444 = int_to_ptr.vmem [resolvable:$true] %s443
          %449 = dma.vmem_to_hbm [thread:$0]  %s444, 384, %s442, %s430, 128, 128, 8
        $region52: #{tpu_custom_call.1} parent=31 // pred_fallthru
          _
      $region32: #{tpu_custom_call.1} parent=5 // pred_fallthru
        _
      %p450 = scmp.le.s32.totalorder 2, %s16
      // Predicated region
      $region53: #{tpu_custom_call.1} parent=5 // pred_check
        %p451 = pneg %p450
      $region54: #{tpu_custom_call.1} parent=5 // pred_check_branch
        %453 = sbr.rel (%p451) target = $region56
      $region55: #{tpu_custom_call.1} parent=5 // pred_region
        %s454 = ssub.s32 %s16, 2
        // Predicated region
        $region57: #{tpu_custom_call.1} parent=55 // pred_check
          %p455 = pneg %p113
        $region58: #{tpu_custom_call.1} parent=55 // pred_check_branch
          %457 = sbr.rel (%p455) target = $region60
        $region59: #{tpu_custom_call.1} parent=55 // pred_region
          %s458 = sand.u32 %s98, 1
          %s459 = scalar_lea.sflag [#allocation5], %s458
          %s460 = sand.u32 %s98, 1
          %s461 = smul.addr %s460, 24
          %s462 = scalar_lea.vmem [#allocation9], %s461
          %463 = dma.done %s459, 384
        $region60: #{tpu_custom_call.1} parent=55 // pred_fallthru
          _
      $region56: #{tpu_custom_call.1} parent=5 // pred_fallthru
        _
    $region6: #{tpu_custom_call.1} parent=1 // loop_footer
      %s20 = sadd.s32 1, %s16
    $region7: #{tpu_custom_call.1} parent=1 // loop_footer_branch
      %15 = sbr.rel target = $region3
    $region8: #{tpu_custom_call.1} parent=1 // loop_exit
      _
    %464 = vsyncpa [#allocation4], 1
    %s465 = scalar_lea.sflag [#allocation4], 1
    %466 = vsyncpa %s465, 1
    %467 = vsyncpa [#allocation7], 1
    %468 = vsyncpa [#allocation5], 1
    %s469 = scalar_lea.sflag [#allocation5], 1
    %470 = vsyncpa %s469, 1

</llo_original>
